<compile_context>
chip_gen: v7x
topology: tpu7x:2x2x1
jax: 0.10.0
libtpu: 0.0.40
codegen_flags: <defaults>
</compile_context>

<pallas_src>
import jax
import jax.numpy as jnp
from jax.experimental import pallas as pl
from jax.experimental.pallas import tpu as pltpu


def _round_up(x, m):
    return ((x + m - 1) // m) * m


def _decoder_kernel(x_ref, w1_ref, b1_ref, w2_ref, b2_ref, o_ref, acc_ref):
    """Grid = (batch tiles, K tiles).  K is the fc1 reduction axis."""
    k = pl.program_id(1)

    @pl.when(k == 0)
    def _init():
        acc_ref[...] = jnp.zeros_like(acc_ref)

    # fc1 partial: [tb, tk](bf16) @ [tk, H](bf16) accumulated in f32 on the MXU.
    acc_ref[...] += jnp.dot(x_ref[...], w1_ref[...],
                            preferred_element_type=jnp.float32)

    @pl.when(k == pl.num_programs(1) - 1)
    def _finalize():
        h = acc_ref[...] + b1_ref[...]          # f32 bias add (VPU)
        h = jnp.maximum(h, 0.01 * h)            # LeakyReLU(0.01)
        # fc2: cast activations to bf16 for the MXU, accumulate in f32.
        y = jnp.dot(h.astype(w2_ref.dtype), w2_ref[...],
                    preferred_element_type=jnp.float32)
        o_ref[...] = (y + b2_ref[...]).astype(o_ref.dtype)


def prepare_params(w1, b1, w2, b2, *, block_k=512, compute_dtype=jnp.bfloat16):
    """One-time weight prep (hoisted out of the per-call path):
    bias reshape to (1, N), zero-pad output cols to a multiple of 128,
    zero-pad the K axis of w1 to a multiple of the K tile, cast to bf16."""
    b1 = jnp.asarray(b1).reshape(1, -1)
    b2 = jnp.asarray(b2).reshape(1, -1)
    d_in, hidden = w1.shape
    out_size = w2.shape[1]

    out_pad = _round_up(out_size, 128)            # lane-dense output stores
    tk = min(_round_up(block_k, 128), _round_up(d_in, 128))
    k_pad = _round_up(d_in, tk)

    w1p = jnp.pad(w1, ((0, k_pad - d_in), (0, 0))).astype(compute_dtype)
    w2p = jnp.pad(w2, ((0, 0), (0, out_pad - out_size))).astype(compute_dtype)
    b1p = b1.astype(jnp.float32)
    b2p = jnp.pad(b2, ((0, 0), (0, out_pad - out_size))).astype(jnp.float32)

    return {
        "w1": w1p, "b1": b1p, "w2": w2p, "b2": b2p,
        "d_in": d_in, "hidden": hidden,
        "out_size": out_size, "out_pad": out_pad, "tk": tk,
    }


def watermark_decoder(x, params, *, block_b=256):
    """x: [B, input_size]; params from prepare_params. Returns [B, output_size]."""
    w1, b1, w2, b2 = params["w1"], params["b1"], params["w2"], params["b2"]
    d_in, hidden = params["d_in"], params["hidden"]
    out_size, out_pad, tk = params["out_size"], params["out_pad"], params["tk"]

    out_dtype = x.dtype
    B = x.shape[0]
    k_pad = w1.shape[0]

    # Adaptive batch tile: never pad tiny batches up to a huge tile; 16 is the
    # bf16 sublane packing minimum.  Large B keeps block_b (256 default).
    block_b = max(16, min(block_b, _round_up(B, 16)))
    b_pad = _round_up(B, block_b)
    n_b = b_pad // block_b
    n_k = k_pad // tk

    # Per-call input prep: bf16 MXU operand + zero padding of batch / K.
    x_bf = x.astype(jnp.bfloat16)
    if (b_pad != B) or (k_pad != d_in):
        x_bf = jnp.pad(x_bf, ((0, b_pad - B), (0, k_pad - d_in)))

    # VMEM budget derived from actual tile bytes (headroom for Mosaic scratch),
    # capped at v7x's 64 MiB/TC.
    out_bytes = jnp.dtype(out_dtype).itemsize
    vmem_bytes = (
        2 * block_b * tk * 2          # x tiles (double-buffered, bf16)
        + 2 * tk * hidden * 2         # w1 tiles (double-buffered, bf16)
        + hidden * 4                  # b1 (single buffer)
        + hidden * out_pad * 2        # w2 (single buffer, bf16)
        + out_pad * 4                 # b2 (single buffer)
        + 2 * block_b * out_pad * out_bytes   # out tiles (double-buffered)
        + block_b * hidden * 4        # f32 accumulator scratch
    )
    vmem_limit = min(64 * 1024 * 1024,
                     max(16 * 1024 * 1024, int(vmem_bytes * 1.25) + (2 << 20)))

    resident = pl.Buffered(1)   # constant-index blocks: no second buffer

    out_padded = pl.pallas_call(
        _decoder_kernel,
        out_shape=jax.ShapeDtypeStruct((b_pad, out_pad), out_dtype),
        grid_spec=pltpu.PrefetchScalarGridSpec(
            num_scalar_prefetch=0,
            grid=(n_b, n_k),
            in_specs=[
                pl.BlockSpec((block_b, tk), lambda i, k: (i, k)),
                pl.BlockSpec((tk, hidden), lambda i, k: (k, 0)),
                pl.BlockSpec((1, hidden), lambda i, k: (0, 0),
                             pipeline_mode=resident),
                pl.BlockSpec((hidden, out_pad), lambda i, k: (0, 0),
                             pipeline_mode=resident),
                pl.BlockSpec((1, out_pad), lambda i, k: (0, 0),
                             pipeline_mode=resident),
            ],
            out_specs=pl.BlockSpec((block_b, out_pad), lambda i, k: (i, 0)),
            scratch_shapes=[pltpu.VMEM((block_b, hidden), jnp.float32)],
        ),
        compiler_params=pltpu.CompilerParams(
            dimension_semantics=("parallel", "arbitrary"),
            vmem_limit_bytes=vmem_limit,
        ),
    )(x_bf, w1, b1, w2, b2)

    # Slice padded batch rows and padded output columns back off (kernel already
    # emitted the model dtype, so no extra convert pass).
    return out_padded[:B, :out_size]


def init_params(key, input_size, hidden_size, output_size, dtype=jnp.float32):
    """PyTorch nn.Linear-style init (uniform +-1/sqrt(fan_in)); weights stored
    pre-transposed as [in_features, out_features]."""
    k1, k2, k3, k4 = jax.random.split(key, 4)
    bound1 = 1.0 / (input_size ** 0.5)
    bound2 = 1.0 / (hidden_size ** 0.5)
    w1 = jax.random.uniform(k1, (input_size, hidden_size), dtype, -bound1, bound1)
    b1 = jax.random.uniform(k2, (hidden_size,), dtype, -bound1, bound1)
    w2 = jax.random.uniform(k3, (hidden_size, output_size), dtype, -bound2, bound2)
    b2 = jax.random.uniform(k4, (output_size,), dtype, -bound2, bound2)
    return w1, b1, w2, b2


def reference(x, w1, b1, w2, b2):
    h = x @ w1 + b1.reshape(1, -1)
    h = jnp.where(h > 0, h, 0.01 * h)
    return h @ w2 + b2.reshape(1, -1)


if __name__ == "__main__":
    # Small shapes consistent with the module defaults.
    batch = 8
    input_size = 512
    hidden_size = 512
    output_size = 64

    key = jax.random.PRNGKey(0)
    kx, kp = jax.random.split(key)
    x = jax.random.normal(kx, (batch, input_size), dtype=jnp.float32)
    w1, b1, w2, b2 = init_params(kp, input_size, hidden_size, output_size)

    params = prepare_params(w1, b1, w2, b2)      # one-time weight prep
    out = watermark_decoder(x, params)
    out = jax.block_until_ready(out)

    ref = reference(x, w1, b1, w2, b2)
    assert out.shape == (batch, output_size)
    # bf16 MXU operands with f32 accumulation: relaxed tolerance vs f32 reference.
    # TODO(synk): keep the (small) fc1 matmul in f32 if watermark-bit thresholds
    # sit near the decision boundary.
    assert jnp.allclose(out, ref, atol=5e-2, rtol=5e-2), "mismatch vs reference"

    print("KERNEL_OK")
</pallas_src>

<mosaic_0001>
module attributes {stable_mosaic.version = 11 : i64} {
  func.func @_decoder_kernel(%arg0: i32, %arg1: i32, %arg2: memref<16x512xbf16, #tpu.memory_space<vmem>>, %arg3: memref<512x512xbf16, #tpu.memory_space<vmem>>, %arg4: memref<1x512xf32, #tpu.memory_space<vmem>>, %arg5: memref<512x128xbf16, #tpu.memory_space<vmem>>, %arg6: memref<1x128xf32, #tpu.memory_space<vmem>>, %arg7: memref<16x128xf32, #tpu.memory_space<vmem>>, %arg8: memref<16x512xf32, #tpu.memory_space<vmem>>) attributes {dimension_semantics = [#tpu.dimension_semantics<parallel>, #tpu.dimension_semantics<arbitrary>], iteration_bounds = array<i64: 1, 1>, scalar_prefetch = 0 : i64, scratch_operands = 1 : i64, tpu.core_type = #tpu.core_type<tc>, window_params = [{transform_indices = @transform_0, window_bounds = array<i64: 16, 512>}, {transform_indices = @transform_1, window_bounds = array<i64: 512, 512>}, {pipeline_mode = #tpu.pipeline_mode<synchronous>, transform_indices = @transform_2, window_bounds = array<i64: 1, 512>}, {pipeline_mode = #tpu.pipeline_mode<synchronous>, transform_indices = @transform_3, window_bounds = array<i64: 512, 128>}, {pipeline_mode = #tpu.pipeline_mode<synchronous>, transform_indices = @transform_4, window_bounds = array<i64: 1, 128>}, {transform_indices = @transform_5, window_bounds = array<i64: 16, 128>}]} {
    %c0_i32 = arith.constant 0 : i32
    %0 = arith.cmpi eq, %arg1, %c0_i32 : i32
    %1 = arith.extui %0 : i1 to i32
    %c0_i32_0 = arith.constant 0 : i32
    %2 = arith.cmpi ne, %1, %c0_i32_0 : i32
    scf.if %2 {
      %cst_10 = arith.constant 0.000000e+00 : f32
      %12 = vector.broadcast %cst_10 : f32 to vector<16x512xf32>
      %c0_11 = arith.constant 0 : index
      %c0_12 = arith.constant 0 : index
      %13 = vector.load %arg8[%c0_11, %c0_12] : memref<16x512xf32, #tpu.memory_space<vmem>>, vector<16x512xf32>
      tpu.vector_store %arg8[%c0_11, %c0_12], %12 {strides = array<i32>} : memref<16x512xf32, #tpu.memory_space<vmem>>, vector<16x512xf32>,
    } else {
    }
    %c0 = arith.constant 0 : index
    %c0_1 = arith.constant 0 : index
    %3 = vector.load %arg8[%c0, %c0_1] : memref<16x512xf32, #tpu.memory_space<vmem>>, vector<16x512xf32>
    %c0_2 = arith.constant 0 : index
    %c0_3 = arith.constant 0 : index
    %4 = vector.load %arg2[%c0_2, %c0_3] : memref<16x512xbf16, #tpu.memory_space<vmem>>, vector<16x512xbf16>
    %c0_4 = arith.constant 0 : index
    %c0_5 = arith.constant 0 : index
    %5 = vector.load %arg3[%c0_4, %c0_5] : memref<512x512xbf16, #tpu.memory_space<vmem>>, vector<512x512xbf16>
    %cst = arith.constant dense<0.000000e+00> : vector<16x512xf32>
    %6 = tpu.matmul %4, %5, %cst {dimension_numbers = #tpu.dot_dimension_numbers<[1], [0], [0], [1], [0, 0, 1, 1], [], []>} : vector<16x512xbf16>, vector<512x512xbf16>, vector<16x512xf32> -> vector<16x512xf32>
    %7 = arith.addf %3, %6 : vector<16x512xf32>
    %c0_6 = arith.constant 0 : index
    %c0_7 = arith.constant 0 : index
    %8 = vector.load %arg8[%c0_6, %c0_7] : memref<16x512xf32, #tpu.memory_space<vmem>>, vector<16x512xf32>
    tpu.vector_store %arg8[%c0_6, %c0_7], %7 {strides = array<i32>} : memref<16x512xf32, #tpu.memory_space<vmem>>, vector<16x512xf32>,
    %c0_i32_8 = arith.constant 0 : i32
    %9 = arith.cmpi eq, %arg1, %c0_i32_8 : i32
    %10 = arith.extui %9 : i1 to i32
    %c0_i32_9 = arith.constant 0 : i32
    %11 = arith.cmpi ne, %10, %c0_i32_9 : i32
    scf.if %11 {
      %c0_10 = arith.constant 0 : index
      %c0_11 = arith.constant 0 : index
      %12 = vector.load %arg8[%c0_10, %c0_11] : memref<16x512xf32, #tpu.memory_space<vmem>>, vector<16x512xf32>
      %c0_12 = arith.constant 0 : index
      %c0_13 = arith.constant 0 : index
      %13 = vector.load %arg4[%c0_12, %c0_13] : memref<1x512xf32, #tpu.memory_space<vmem>>, vector<1x512xf32>
      %14 = vector.broadcast %13 : vector<1x512xf32> to vector<16x512xf32>
      %15 = arith.addf %12, %14 : vector<16x512xf32>
      %cst_14 = arith.constant 0.00999999977 : f32
      %16 = vector.broadcast %cst_14 : f32 to vector<16x512xf32>
      %17 = arith.mulf %16, %15 : vector<16x512xf32>
      %18 = arith.maximumf %15, %17 : vector<16x512xf32>
      %19 = arith.truncf %18 : vector<16x512xf32> to vector<16x512xbf16>
      %c0_15 = arith.constant 0 : index
      %c0_16 = arith.constant 0 : index
      %20 = vector.load %arg5[%c0_15, %c0_16] : memref<512x128xbf16, #tpu.memory_space<vmem>>, vector<512x128xbf16>
      %cst_17 = arith.constant dense<0.000000e+00> : vector<16x128xf32>
      %21 = tpu.matmul %19, %20, %cst_17 {dimension_numbers = #tpu.dot_dimension_numbers<[1], [0], [0], [1], [0, 0, 1, 1], [], []>} : vector<16x512xbf16>, vector<512x128xbf16>, vector<16x128xf32> -> vector<16x128xf32>
      %c0_18 = arith.constant 0 : index
      %c0_19 = arith.constant 0 : index
      %22 = vector.load %arg6[%c0_18, %c0_19] : memref<1x128xf32, #tpu.memory_space<vmem>>, vector<1x128xf32>
      %23 = vector.broadcast %22 : vector<1x128xf32> to vector<16x128xf32>
      %24 = arith.addf %21, %23 : vector<16x128xf32>
      %c0_20 = arith.constant 0 : index
      %c0_21 = arith.constant 0 : index
      %25 = vector.load %arg7[%c0_20, %c0_21] : memref<16x128xf32, #tpu.memory_space<vmem>>, vector<16x128xf32>
      tpu.vector_store %arg7[%c0_20, %c0_21], %24 {strides = array<i32>} : memref<16x128xf32, #tpu.memory_space<vmem>>, vector<16x128xf32>,
    } else {
    }
    return
  }
  func.func @transform_0(%arg0: i32, %arg1: i32) -> (i32, i32) {
    %c0_i32 = arith.constant 0 : i32
    return %arg0, %arg1 : i32, i32
  }
  func.func @transform_1(%arg0: i32, %arg1: i32) -> (i32, i32) {
    %c0_i32 = arith.constant 0 : i32
    %c0_i32_0 = arith.constant 0 : i32
    return %arg1, %c0_i32 : i32, i32
  }
  func.func @transform_2(%arg0: i32, %arg1: i32) -> (i32, i32) {
    %c0_i32 = arith.constant 0 : i32
    %c0_i32_0 = arith.constant 0 : i32
    %c0_i32_1 = arith.constant 0 : i32
    return %c0_i32, %c0_i32_0 : i32, i32
  }
  func.func @transform_3(%arg0: i32, %arg1: i32) -> (i32, i32) {
    %c0_i32 = arith.constant 0 : i32
    %c0_i32_0 = arith.constant 0 : i32
    %c0_i32_1 = arith.constant 0 : i32
    return %c0_i32, %c0_i32_0 : i32, i32
  }
  func.func @transform_4(%arg0: i32, %arg1: i32) -> (i32, i32) {
    %c0_i32 = arith.constant 0 : i32
    %c0_i32_0 = arith.constant 0 : i32
    %c0_i32_1 = arith.constant 0 : i32
    return %c0_i32, %c0_i32_0 : i32, i32
  }
  func.func @transform_5(%arg0: i32, %arg1: i32) -> (i32, i32) {
    %c0_i32 = arith.constant 0 : i32
    %c0_i32_0 = arith.constant 0 : i32
    return %arg0, %c0_i32 : i32, i32
  }
}

</mosaic_0001>

<llo_original>
// kernel: tpu_custom_call.1
$region0: #{tpu_custom_call.1}
  #allocation0 [shape = 'u32[]', space=smem, size = 0x4, offset = 0x4, fixed_abs, tag = 'smem constant byte address 0x4 - core index']
  #allocation1 [shape = 'u32[144,128]{1,0:T(1,128)}', space=vmem, size = 0x12000, scoped, tag = 'internal scratch']
  #allocation2 [shape = 'f32[16,512]{1,0:T(8,128)}', space=vmem, size = 0x8000, scoped, tag = 'scratch operand']
  %s0 = inlined_call_operand.hbm [shape: bf16[16,512], index: 0, kind: input, shape index: {}]
  %s1 = inlined_call_operand.hbm [shape: bf16[512,512], index: 1, kind: input, shape index: {}]
  %s2 = inlined_call_operand.vmem [shape: f32[1,512], index: 2, kind: input, shape index: {}]
  %s3 = inlined_call_operand.hbm [shape: bf16[512,128], index: 3, kind: input, shape index: {}]
  %s4 = inlined_call_operand.vmem [shape: f32[1,128], index: 4, kind: input, shape index: {}]
  %s5 = inlined_call_operand.hbm [shape: f32[16,128], index: 5, kind: output, shape index: {}]
  %s6 = sld [smem:[#allocation0]]
  $region50: #{tpu_custom_call.1} parent=0
    _
  %s8 = ssub.s32 1, %s6
  %s9 = scalar_select 0, %s8, %s6
  $region1: #{tpu_custom_call.1} parent=0
    #allocation3 [shape = 'u8[16384]{0}', space=vmem, size = 0x4000, scoped, tag = 'input window, operand 0, single buffered']
    #allocation4 [shape = 's32[1]{0}', space=sflag, size = 0x4, scoped, tag = 'scoped memory for tpu_custom_call.1']
    #allocation5 [shape = 's32[1]{0}', space=sflag, size = 0x4, scoped, tag = 'scoped memory for tpu_custom_call.1']
    #allocation6 [shape = 'u8[524288]{0}', space=vmem, size = 0x80000, scoped, tag = 'input window, operand 1, single buffered']
    #allocation7 [shape = 's32[1]{0}', space=sflag, size = 0x4, scoped, tag = 'scoped memory for tpu_custom_call.1']
    #allocation8 [shape = 'u8[131072]{0}', space=vmem, size = 0x20000, scoped, tag = 'input window, operand 3, single buffered']
    #allocation9 [shape = 'u8[8192]{0}', space=vmem, size = 0x2000, scoped, tag = 'output window, operand 0, single buffered']
    %10 = vsyncpa [#allocation4], 0
    %11 = vsyncpa [#allocation7], 0
    %12 = vsyncpa [#allocation5], 0
    // Predicated region
    $region2: #{tpu_custom_call.1} parent=1 // pred_check
      _
    $region3: #{tpu_custom_call.1} parent=1 // pred_check_branch
      %14 = sbr.rel (0) target = $region5
    $region4: #{tpu_custom_call.1} parent=1 // pred_region
      %s16 = ssub.s32 512, 512
      %17 = vsyncadd [#allocation4], %s16
      %s18 = sshll.u32 [#allocation3], 4
      %s19 = int_to_ptr.vmem [resolvable:$true] %s18
      %24 = dma.hbm_to_vmem [thread:$0]  %s0, 512, %s19, [#allocation4], 256, 256, 16
    $region5: #{tpu_custom_call.1} parent=1 // pred_fallthru
      _
    // Predicated region
    $region6: #{tpu_custom_call.1} parent=1 // pred_check
      _
    $region7: #{tpu_custom_call.1} parent=1 // pred_check_branch
      %26 = sbr.rel (0) target = $region9
    $region8: #{tpu_custom_call.1} parent=1 // pred_region
      %s28 = ssub.s32 16384, 16384
      %29 = vsyncadd [#allocation7], %s28
      %s30 = sshll.u32 [#allocation6], 4
      %s31 = int_to_ptr.vmem [resolvable:$true] %s30
      %36 = dma.hbm_to_vmem [thread:$0]  %s1, 16384, %s31, [#allocation7], 256, 256, 16
    $region9: #{tpu_custom_call.1} parent=1 // pred_fallthru
      _
    // Predicated region
    $region10: #{tpu_custom_call.1} parent=1 // pred_check
      _
    $region11: #{tpu_custom_call.1} parent=1 // pred_check_branch
      %38 = sbr.rel (0) target = $region13
    $region12: #{tpu_custom_call.1} parent=1 // pred_region
      _
    $region13: #{tpu_custom_call.1} parent=1 // pred_fallthru
      _
    // Predicated region
    $region14: #{tpu_custom_call.1} parent=1 // pred_check
      _
    $region15: #{tpu_custom_call.1} parent=1 // pred_check_branch
      %40 = sbr.rel (0) target = $region17
    $region16: #{tpu_custom_call.1} parent=1 // pred_region
      %s42 = ssub.s32 4096, 4096
      %43 = vsyncadd [#allocation7], %s42
      %s44 = sshll.u32 [#allocation8], 4
      %s45 = int_to_ptr.vmem [resolvable:$true] %s44
      %50 = dma.hbm_to_vmem [thread:$0]  %s3, 4096, %s45, [#allocation7], 64, 64, 4
    $region17: #{tpu_custom_call.1} parent=1 // pred_fallthru
      _
    // Predicated region
    $region18: #{tpu_custom_call.1} parent=1 // pred_check
      _
    $region19: #{tpu_custom_call.1} parent=1 // pred_check_branch
      %52 = sbr.rel (0) target = $region21
    $region20: #{tpu_custom_call.1} parent=1 // pred_region
      _
    $region21: #{tpu_custom_call.1} parent=1 // pred_fallthru
      _
    // Predicated region
    $region22: #{tpu_custom_call.1} parent=1 // pred_check
      _
    $region23: #{tpu_custom_call.1} parent=1 // pred_check_branch
      %54 = sbr.rel (0) target = $region25
    $region24: #{tpu_custom_call.1} parent=1 // pred_region
      %55 = dma.done [#allocation4], 512
    $region25: #{tpu_custom_call.1} parent=1 // pred_fallthru
      _
    // Predicated region
    $region26: #{tpu_custom_call.1} parent=1 // pred_check
      _
    $region27: #{tpu_custom_call.1} parent=1 // pred_check_branch
      %57 = sbr.rel (0) target = $region29
    $region28: #{tpu_custom_call.1} parent=1 // pred_region
      %58 = dma.done [#allocation7], 16384
    $region29: #{tpu_custom_call.1} parent=1 // pred_fallthru
      _
    // Predicated region
    $region30: #{tpu_custom_call.1} parent=1 // pred_check
      _
    $region31: #{tpu_custom_call.1} parent=1 // pred_check_branch
      %60 = sbr.rel (0) target = $region33
    $region32: #{tpu_custom_call.1} parent=1 // pred_region
      %61 = dma.done [#allocation7], 4096
    $region33: #{tpu_custom_call.1} parent=1 // pred_fallthru
      _
    %p63 = scmp.eq.s32.totalorder 0, 0
    // Predicated region
    $region34: #{tpu_custom_call.1} parent=1 // pred_check
      %p64 = pneg %p63
    $region35: #{tpu_custom_call.1} parent=1 // pred_check_branch
      %66 = sbr.rel (%p64) target = $region37
    $region36: #{tpu_custom_call.1} parent=1 // pred_region
      %67 = vst [vmem:[#allocation2] sm:$0xff] 0.0
      %68 = vst [vmem:[#allocation2 + $0x8] sm:$0xff] 0.0
      %69 = vst [vmem:[#allocation2 + $0x10] sm:$0xff] 0.0
      %70 = vst [vmem:[#allocation2 + $0x18] sm:$0xff] 0.0
      %71 = vst [vmem:[#allocation2 + $0x20] sm:$0xff] 0.0
      %72 = vst [vmem:[#allocation2 + $0x28] sm:$0xff] 0.0
      %73 = vst [vmem:[#allocation2 + $0x30] sm:$0xff] 0.0
      %74 = vst [vmem:[#allocation2 + $0x38] sm:$0xff] 0.0
    $region37: #{tpu_custom_call.1} parent=1 // pred_fallthru
      _
    %v75 = vld [vmem:[#allocation2] sm:$0xff]
    %v76 = vld [vmem:[#allocation2 + $0x8] sm:$0xff]
    %v77 = vld [vmem:[#allocation2 + $0x10] sm:$0xff]
    %v78 = vld [vmem:[#allocation2 + $0x18] sm:$0xff]
    %v79 = vld [vmem:[#allocation2 + $0x20] sm:$0xff]
    %v80 = vld [vmem:[#allocation2 + $0x28] sm:$0xff]
    %v81 = vld [vmem:[#allocation2 + $0x30] sm:$0xff]
    %v82 = vld [vmem:[#allocation2 + $0x38] sm:$0xff]
    %v83 = vld [vmem:[#allocation3] sm:$0xff]
    %v84 = vld [vmem:[#allocation3 + $0x8] sm:$0xff]
    %v85 = vld [vmem:[#allocation3 + $0x10] sm:$0xff]
    %v86 = vld [vmem:[#allocation3 + $0x18] sm:$0xff]
    %v87 = vld [vmem:[#allocation6] sm:$0xff]
    %v88 = vld [vmem:[#allocation6 + $0x8] sm:$0xff]
    %v89 = vld [vmem:[#allocation6 + $0x10] sm:$0xff]
    %v90 = vld [vmem:[#allocation6 + $0x18] sm:$0xff]
    %v91 = vld [vmem:[#allocation6 + $0x20] sm:$0xff]
    %v92 = vld [vmem:[#allocation6 + $0x28] sm:$0xff]
    %v93 = vld [vmem:[#allocation6 + $0x30] sm:$0xff]
    %v94 = vld [vmem:[#allocation6 + $0x38] sm:$0xff]
    %v95 = vld [vmem:[#allocation6 + $0x40] sm:$0xff]
    %v96 = vld [vmem:[#allocation6 + $0x48] sm:$0xff]
    %v97 = vld [vmem:[#allocation6 + $0x50] sm:$0xff]
    %v98 = vld [vmem:[#allocation6 + $0x58] sm:$0xff]
    %v99 = vld [vmem:[#allocation6 + $0x60] sm:$0xff]
    %v100 = vld [vmem:[#allocation6 + $0x68] sm:$0xff]
    %v101 = vld [vmem:[#allocation6 + $0x70] sm:$0xff]
    %v102 = vld [vmem:[#allocation6 + $0x78] sm:$0xff]
    %v103 = vld [vmem:[#allocation6 + $0x80] sm:$0xff]
    %v104 = vld [vmem:[#allocation6 + $0x88] sm:$0xff]
    %v105 = vld [vmem:[#allocation6 + $0x90] sm:$0xff]
    %v106 = vld [vmem:[#allocation6 + $0x98] sm:$0xff]
    %v107 = vld [vmem:[#allocation6 + $0xa0] sm:$0xff]
    %v108 = vld [vmem:[#allocation6 + $0xa8] sm:$0xff]
    %v109 = vld [vmem:[#allocation6 + $0xb0] sm:$0xff]
    %v110 = vld [vmem:[#allocation6 + $0xb8] sm:$0xff]
    %v111 = vld [vmem:[#allocation6 + $0xc0] sm:$0xff]
    %v112 = vld [vmem:[#allocation6 + $0xc8] sm:$0xff]
    %v113 = vld [vmem:[#allocation6 + $0xd0] sm:$0xff]
    %v114 = vld [vmem:[#allocation6 + $0xd8] sm:$0xff]
    %v115 = vld [vmem:[#allocation6 + $0xe0] sm:$0xff]
    %v116 = vld [vmem:[#allocation6 + $0xe8] sm:$0xff]
    %v117 = vld [vmem:[#allocation6 + $0xf0] sm:$0xff]
    %v118 = vld [vmem:[#allocation6 + $0xf8] sm:$0xff]
    %v119 = vld [vmem:[#allocation6 + $0x100] sm:$0xff]
    %v120 = vld [vmem:[#allocation6 + $0x108] sm:$0xff]
    %v121 = vld [vmem:[#allocation6 + $0x110] sm:$0xff]
    %v122 = vld [vmem:[#allocation6 + $0x118] sm:$0xff]
    %v123 = vld [vmem:[#allocation6 + $0x120] sm:$0xff]
    %v124 = vld [vmem:[#allocation6 + $0x128] sm:$0xff]
    %v125 = vld [vmem:[#allocation6 + $0x130] sm:$0xff]
    %v126 = vld [vmem:[#allocation6 + $0x138] sm:$0xff]
    %v127 = vld [vmem:[#allocation6 + $0x140] sm:$0xff]
    %v128 = vld [vmem:[#allocation6 + $0x148] sm:$0xff]
    %v129 = vld [vmem:[#allocation6 + $0x150] sm:$0xff]
    %v130 = vld [vmem:[#allocation6 + $0x158] sm:$0xff]
    %v131 = vld [vmem:[#allocation6 + $0x160] sm:$0xff]
    %v132 = vld [vmem:[#allocation6 + $0x168] sm:$0xff]
    %v133 = vld [vmem:[#allocation6 + $0x170] sm:$0xff]
    %v134 = vld [vmem:[#allocation6 + $0x178] sm:$0xff]
    %v135 = vld [vmem:[#allocation6 + $0x180] sm:$0xff]
    %v136 = vld [vmem:[#allocation6 + $0x188] sm:$0xff]
    %v137 = vld [vmem:[#allocation6 + $0x190] sm:$0xff]
    %v138 = vld [vmem:[#allocation6 + $0x198] sm:$0xff]
    %v139 = vld [vmem:[#allocation6 + $0x1a0] sm:$0xff]
    %v140 = vld [vmem:[#allocation6 + $0x1a8] sm:$0xff]
    %v141 = vld [vmem:[#allocation6 + $0x1b0] sm:$0xff]
    %v142 = vld [vmem:[#allocation6 + $0x1b8] sm:$0xff]
    %v143 = vld [vmem:[#allocation6 + $0x1c0] sm:$0xff]
    %v144 = vld [vmem:[#allocation6 + $0x1c8] sm:$0xff]
    %v145 = vld [vmem:[#allocation6 + $0x1d0] sm:$0xff]
    %v146 = vld [vmem:[#allocation6 + $0x1d8] sm:$0xff]
    %v147 = vld [vmem:[#allocation6 + $0x1e0] sm:$0xff]
    %v148 = vld [vmem:[#allocation6 + $0x1e8] sm:$0xff]
    %v149 = vld [vmem:[#allocation6 + $0x1f0] sm:$0xff]
    %v150 = vld [vmem:[#allocation6 + $0x1f8] sm:$0xff]
    %v151 = vld [vmem:[#allocation6 + $0x200] sm:$0xff]
    %v152 = vld [vmem:[#allocation6 + $0x208] sm:$0xff]
    %v153 = vld [vmem:[#allocation6 + $0x210] sm:$0xff]
    %v154 = vld [vmem:[#allocation6 + $0x218] sm:$0xff]
    %v155 = vld [vmem:[#allocation6 + $0x220] sm:$0xff]
    %v156 = vld [vmem:[#allocation6 + $0x228] sm:$0xff]
    %v157 = vld [vmem:[#allocation6 + $0x230] sm:$0xff]
    %v158 = vld [vmem:[#allocation6 + $0x238] sm:$0xff]
    %v159 = vld [vmem:[#allocation6 + $0x240] sm:$0xff]
    %v160 = vld [vmem:[#allocation6 + $0x248] sm:$0xff]
    %v161 = vld [vmem:[#allocation6 + $0x250] sm:$0xff]
    %v162 = vld [vmem:[#allocation6 + $0x258] sm:$0xff]
    %v163 = vld [vmem:[#allocation6 + $0x260] sm:$0xff]
    %v164 = vld [vmem:[#allocation6 + $0x268] sm:$0xff]
    %v165 = vld [vmem:[#allocation6 + $0x270] sm:$0xff]
    %v166 = vld [vmem:[#allocation6 + $0x278] sm:$0xff]
    %v167 = vld [vmem:[#allocation6 + $0x280] sm:$0xff]
    %v168 = vld [vmem:[#allocation6 + $0x288] sm:$0xff]
    %v169 = vld [vmem:[#allocation6 + $0x290] sm:$0xff]
    %v170 = vld [vmem:[#allocation6 + $0x298] sm:$0xff]
    %v171 = vld [vmem:[#allocation6 + $0x2a0] sm:$0xff]
    %v172 = vld [vmem:[#allocation6 + $0x2a8] sm:$0xff]
    %v173 = vld [vmem:[#allocation6 + $0x2b0] sm:$0xff]
    %v174 = vld [vmem:[#allocation6 + $0x2b8] sm:$0xff]
    %v175 = vld [vmem:[#allocation6 + $0x2c0] sm:$0xff]
    %v176 = vld [vmem:[#allocation6 + $0x2c8] sm:$0xff]
    %v177 = vld [vmem:[#allocation6 + $0x2d0] sm:$0xff]
    %v178 = vld [vmem:[#allocation6 + $0x2d8] sm:$0xff]
    %v179 = vld [vmem:[#allocation6 + $0x2e0] sm:$0xff]
    %v180 = vld [vmem:[#allocation6 + $0x2e8] sm:$0xff]
    %v181 = vld [vmem:[#allocation6 + $0x2f0] sm:$0xff]
    %v182 = vld [vmem:[#allocation6 + $0x2f8] sm:$0xff]
    %v183 = vld [vmem:[#allocation6 + $0x300] sm:$0xff]
    %v184 = vld [vmem:[#allocation6 + $0x308] sm:$0xff]
    %v185 = vld [vmem:[#allocation6 + $0x310] sm:$0xff]
    %v186 = vld [vmem:[#allocation6 + $0x318] sm:$0xff]
    %v187 = vld [vmem:[#allocation6 + $0x320] sm:$0xff]
    %v188 = vld [vmem:[#allocation6 + $0x328] sm:$0xff]
    %v189 = vld [vmem:[#allocation6 + $0x330] sm:$0xff]
    %v190 = vld [vmem:[#allocation6 + $0x338] sm:$0xff]
    %v191 = vld [vmem:[#allocation6 + $0x340] sm:$0xff]
    %v192 = vld [vmem:[#allocation6 + $0x348] sm:$0xff]
    %v193 = vld [vmem:[#allocation6 + $0x350] sm:$0xff]
    %v194 = vld [vmem:[#allocation6 + $0x358] sm:$0xff]
    %v195 = vld [vmem:[#allocation6 + $0x360] sm:$0xff]
    %v196 = vld [vmem:[#allocation6 + $0x368] sm:$0xff]
    %v197 = vld [vmem:[#allocation6 + $0x370] sm:$0xff]
    %v198 = vld [vmem:[#allocation6 + $0x378] sm:$0xff]
    %v199 = vld [vmem:[#allocation6 + $0x380] sm:$0xff]
    %v200 = vld [vmem:[#allocation6 + $0x388] sm:$0xff]
    %v201 = vld [vmem:[#allocation6 + $0x390] sm:$0xff]
    %v202 = vld [vmem:[#allocation6 + $0x398] sm:$0xff]
    %v203 = vld [vmem:[#allocation6 + $0x3a0] sm:$0xff]
    %v204 = vld [vmem:[#allocation6 + $0x3a8] sm:$0xff]
    %v205 = vld [vmem:[#allocation6 + $0x3b0] sm:$0xff]
    %v206 = vld [vmem:[#allocation6 + $0x3b8] sm:$0xff]
    %v207 = vld [vmem:[#allocation6 + $0x3c0] sm:$0xff]
    %v208 = vld [vmem:[#allocation6 + $0x3c8] sm:$0xff]
    %v209 = vld [vmem:[#allocation6 + $0x3d0] sm:$0xff]
    %v210 = vld [vmem:[#allocation6 + $0x3d8] sm:$0xff]
    %v211 = vld [vmem:[#allocation6 + $0x3e0] sm:$0xff]
    %v212 = vld [vmem:[#allocation6 + $0x3e8] sm:$0xff]
    %v213 = vld [vmem:[#allocation6 + $0x3f0] sm:$0xff]
    %v214 = vld [vmem:[#allocation6 + $0x3f8] sm:$0xff]
    %v219 = vunpack.c.l.b16 %v83
    %v220 = vunpack.c.h.b16 %v83
    %v221 = vunpack.c.l.b16 %v84
    %v222 = vunpack.c.h.b16 %v84
    %v223 = vunpack.c.l.b16 %v85
    %v224 = vunpack.c.h.b16 %v85
    %v225 = vunpack.c.l.b16 %v86
    %v226 = vunpack.c.h.b16 %v86
    %v227 = vpack.c.b16 %v223, %v219
    %v228 = vpack.c.b16 %v224, %v220
    %v229 = vpack.c.b16 %v225, %v221
    %v230 = vpack.c.b16 %v226, %v222
    %v363 = vunpack.c.l.b16 %v87
    %v364 = vunpack.c.h.b16 %v87
    %v365 = vunpack.c.l.b16 %v88
    %v366 = vunpack.c.h.b16 %v88
    %v367 = vunpack.c.l.b16 %v89
    %v368 = vunpack.c.h.b16 %v89
    %v369 = vunpack.c.l.b16 %v90
    %v370 = vunpack.c.h.b16 %v90
    %v371 = vunpack.c.l.b16 %v91
    %v372 = vunpack.c.h.b16 %v91
    %v373 = vunpack.c.l.b16 %v92
    %v374 = vunpack.c.h.b16 %v92
    %v375 = vunpack.c.l.b16 %v93
    %v376 = vunpack.c.h.b16 %v93
    %v377 = vunpack.c.l.b16 %v94
    %v378 = vunpack.c.h.b16 %v94
    %v379 = vunpack.c.l.b16 %v95
    %v380 = vunpack.c.h.b16 %v95
    %v381 = vunpack.c.l.b16 %v96
    %v382 = vunpack.c.h.b16 %v96
    %v383 = vunpack.c.l.b16 %v97
    %v384 = vunpack.c.h.b16 %v97
    %v385 = vunpack.c.l.b16 %v98
    %v386 = vunpack.c.h.b16 %v98
    %v387 = vunpack.c.l.b16 %v99
    %v388 = vunpack.c.h.b16 %v99
    %v389 = vunpack.c.l.b16 %v100
    %v390 = vunpack.c.h.b16 %v100
    %v391 = vunpack.c.l.b16 %v101
    %v392 = vunpack.c.h.b16 %v101
    %v393 = vunpack.c.l.b16 %v102
    %v394 = vunpack.c.h.b16 %v102
    %v395 = vunpack.c.l.b16 %v103
    %v396 = vunpack.c.h.b16 %v103
    %v397 = vunpack.c.l.b16 %v104
    %v398 = vunpack.c.h.b16 %v104
    %v399 = vunpack.c.l.b16 %v105
    %v400 = vunpack.c.h.b16 %v105
    %v401 = vunpack.c.l.b16 %v106
    %v402 = vunpack.c.h.b16 %v106
    %v403 = vunpack.c.l.b16 %v107
    %v404 = vunpack.c.h.b16 %v107
    %v405 = vunpack.c.l.b16 %v108
    %v406 = vunpack.c.h.b16 %v108
    %v407 = vunpack.c.l.b16 %v109
    %v408 = vunpack.c.h.b16 %v109
    %v409 = vunpack.c.l.b16 %v110
    %v410 = vunpack.c.h.b16 %v110
    %v411 = vunpack.c.l.b16 %v111
    %v412 = vunpack.c.h.b16 %v111
    %v413 = vunpack.c.l.b16 %v112
    %v414 = vunpack.c.h.b16 %v112
    %v415 = vunpack.c.l.b16 %v113
    %v416 = vunpack.c.h.b16 %v113
    %v417 = vunpack.c.l.b16 %v114
    %v418 = vunpack.c.h.b16 %v114
    %v419 = vunpack.c.l.b16 %v115
    %v420 = vunpack.c.h.b16 %v115
    %v421 = vunpack.c.l.b16 %v116
    %v422 = vunpack.c.h.b16 %v116
    %v423 = vunpack.c.l.b16 %v117
    %v424 = vunpack.c.h.b16 %v117
    %v425 = vunpack.c.l.b16 %v118
    %v426 = vunpack.c.h.b16 %v118
    %v427 = vunpack.c.l.b16 %v119
    %v428 = vunpack.c.h.b16 %v119
    %v429 = vunpack.c.l.b16 %v120
    %v430 = vunpack.c.h.b16 %v120
    %v431 = vunpack.c.l.b16 %v121
    %v432 = vunpack.c.h.b16 %v121
    %v433 = vunpack.c.l.b16 %v122
    %v434 = vunpack.c.h.b16 %v122
    %v435 = vunpack.c.l.b16 %v123
    %v436 = vunpack.c.h.b16 %v123
    %v437 = vunpack.c.l.b16 %v124
    %v438 = vunpack.c.h.b16 %v124
    %v439 = vunpack.c.l.b16 %v125
    %v440 = vunpack.c.h.b16 %v125
    %v441 = vunpack.c.l.b16 %v126
    %v442 = vunpack.c.h.b16 %v126
    %v443 = vunpack.c.l.b16 %v127
    %v444 = vunpack.c.h.b16 %v127
    %v445 = vunpack.c.l.b16 %v128
    %v446 = vunpack.c.h.b16 %v128
    %v447 = vunpack.c.l.b16 %v129
    %v448 = vunpack.c.h.b16 %v129
    %v449 = vunpack.c.l.b16 %v130
    %v450 = vunpack.c.h.b16 %v130
    %v451 = vunpack.c.l.b16 %v131
    %v452 = vunpack.c.h.b16 %v131
    %v453 = vunpack.c.l.b16 %v132
    %v454 = vunpack.c.h.b16 %v132
    %v455 = vunpack.c.l.b16 %v133
    %v456 = vunpack.c.h.b16 %v133
    %v457 = vunpack.c.l.b16 %v134
    %v458 = vunpack.c.h.b16 %v134
    %v459 = vunpack.c.l.b16 %v135
    %v460 = vunpack.c.h.b16 %v135
    %v461 = vunpack.c.l.b16 %v136
    %v462 = vunpack.c.h.b16 %v136
    %v463 = vunpack.c.l.b16 %v137
    %v464 = vunpack.c.h.b16 %v137
    %v465 = vunpack.c.l.b16 %v138
    %v466 = vunpack.c.h.b16 %v138
    %v467 = vunpack.c.l.b16 %v139
    %v468 = vunpack.c.h.b16 %v139
    %v469 = vunpack.c.l.b16 %v140
    %v470 = vunpack.c.h.b16 %v140
    %v471 = vunpack.c.l.b16 %v141
    %v472 = vunpack.c.h.b16 %v141
    %v473 = vunpack.c.l.b16 %v142
    %v474 = vunpack.c.h.b16 %v142
    %v475 = vunpack.c.l.b16 %v143
    %v476 = vunpack.c.h.b16 %v143
    %v477 = vunpack.c.l.b16 %v144
    %v478 = vunpack.c.h.b16 %v144
    %v479 = vunpack.c.l.b16 %v145
    %v480 = vunpack.c.h.b16 %v145
    %v481 = vunpack.c.l.b16 %v146
    %v482 = vunpack.c.h.b16 %v146
    %v483 = vunpack.c.l.b16 %v147
    %v484 = vunpack.c.h.b16 %v147
    %v485 = vunpack.c.l.b16 %v148
    %v486 = vunpack.c.h.b16 %v148
    %v487 = vunpack.c.l.b16 %v149
    %v488 = vunpack.c.h.b16 %v149
    %v489 = vunpack.c.l.b16 %v150
    %v490 = vunpack.c.h.b16 %v150
    %v491 = vunpack.c.l.b16 %v151
    %v492 = vunpack.c.h.b16 %v151
    %v493 = vunpack.c.l.b16 %v152
    %v494 = vunpack.c.h.b16 %v152
    %v495 = vunpack.c.l.b16 %v153
    %v496 = vunpack.c.h.b16 %v153
    %v497 = vunpack.c.l.b16 %v154
    %v498 = vunpack.c.h.b16 %v154
    %v499 = vunpack.c.l.b16 %v155
    %v500 = vunpack.c.h.b16 %v155
    %v501 = vunpack.c.l.b16 %v156
    %v502 = vunpack.c.h.b16 %v156
    %v503 = vunpack.c.l.b16 %v157
    %v504 = vunpack.c.h.b16 %v157
    %v505 = vunpack.c.l.b16 %v158
    %v506 = vunpack.c.h.b16 %v158
    %v507 = vunpack.c.l.b16 %v159
    %v508 = vunpack.c.h.b16 %v159
    %v509 = vunpack.c.l.b16 %v160
    %v510 = vunpack.c.h.b16 %v160
    %v511 = vunpack.c.l.b16 %v161
    %v512 = vunpack.c.h.b16 %v161
    %v513 = vunpack.c.l.b16 %v162
    %v514 = vunpack.c.h.b16 %v162
    %v515 = vunpack.c.l.b16 %v163
    %v516 = vunpack.c.h.b16 %v163
    %v517 = vunpack.c.l.b16 %v164
    %v518 = vunpack.c.h.b16 %v164
    %v519 = vunpack.c.l.b16 %v165
    %v520 = vunpack.c.h.b16 %v165
    %v521 = vunpack.c.l.b16 %v166
    %v522 = vunpack.c.h.b16 %v166
    %v523 = vunpack.c.l.b16 %v167
    %v524 = vunpack.c.h.b16 %v167
    %v525 = vunpack.c.l.b16 %v168
    %v526 = vunpack.c.h.b16 %v168
    %v527 = vunpack.c.l.b16 %v169
    %v528 = vunpack.c.h.b16 %v169
    %v529 = vunpack.c.l.b16 %v170
    %v530 = vunpack.c.h.b16 %v170
    %v531 = vunpack.c.l.b16 %v171
    %v532 = vunpack.c.h.b16 %v171
    %v533 = vunpack.c.l.b16 %v172
    %v534 = vunpack.c.h.b16 %v172
    %v535 = vunpack.c.l.b16 %v173
    %v536 = vunpack.c.h.b16 %v173
    %v537 = vunpack.c.l.b16 %v174
    %v538 = vunpack.c.h.b16 %v174
    %v539 = vunpack.c.l.b16 %v175
    %v540 = vunpack.c.h.b16 %v175
    %v541 = vunpack.c.l.b16 %v176
    %v542 = vunpack.c.h.b16 %v176
    %v543 = vunpack.c.l.b16 %v177
    %v544 = vunpack.c.h.b16 %v177
    %v545 = vunpack.c.l.b16 %v178
    %v546 = vunpack.c.h.b16 %v178
    %v547 = vunpack.c.l.b16 %v179
    %v548 = vunpack.c.h.b16 %v179
    %v549 = vunpack.c.l.b16 %v180
    %v550 = vunpack.c.h.b16 %v180
    %v551 = vunpack.c.l.b16 %v181
    %v552 = vunpack.c.h.b16 %v181
    %v553 = vunpack.c.l.b16 %v182
    %v554 = vunpack.c.h.b16 %v182
    %v555 = vunpack.c.l.b16 %v183
    %v556 = vunpack.c.h.b16 %v183
    %v557 = vunpack.c.l.b16 %v184
    %v558 = vunpack.c.h.b16 %v184
    %v559 = vunpack.c.l.b16 %v185
    %v560 = vunpack.c.h.b16 %v185
    %v561 = vunpack.c.l.b16 %v186
    %v562 = vunpack.c.h.b16 %v186
    %v563 = vunpack.c.l.b16 %v187
    %v564 = vunpack.c.h.b16 %v187
    %v565 = vunpack.c.l.b16 %v188
    %v566 = vunpack.c.h.b16 %v188
    %v567 = vunpack.c.l.b16 %v189
    %v568 = vunpack.c.h.b16 %v189
    %v569 = vunpack.c.l.b16 %v190
    %v570 = vunpack.c.h.b16 %v190
    %v571 = vunpack.c.l.b16 %v191
    %v572 = vunpack.c.h.b16 %v191
    %v573 = vunpack.c.l.b16 %v192
    %v574 = vunpack.c.h.b16 %v192
    %v575 = vunpack.c.l.b16 %v193
    %v576 = vunpack.c.h.b16 %v193
    %v577 = vunpack.c.l.b16 %v194
    %v578 = vunpack.c.h.b16 %v194
    %v579 = vunpack.c.l.b16 %v195
    %v580 = vunpack.c.h.b16 %v195
    %v581 = vunpack.c.l.b16 %v196
    %v582 = vunpack.c.h.b16 %v196
    %v583 = vunpack.c.l.b16 %v197
    %v584 = vunpack.c.h.b16 %v197
    %v585 = vunpack.c.l.b16 %v198
    %v586 = vunpack.c.h.b16 %v198
    %v587 = vunpack.c.l.b16 %v199
    %v588 = vunpack.c.h.b16 %v199
    %v589 = vunpack.c.l.b16 %v200
    %v590 = vunpack.c.h.b16 %v200
    %v591 = vunpack.c.l.b16 %v201
    %v592 = vunpack.c.h.b16 %v201
    %v593 = vunpack.c.l.b16 %v202
    %v594 = vunpack.c.h.b16 %v202
    %v595 = vunpack.c.l.b16 %v203
    %v596 = vunpack.c.h.b16 %v203
    %v597 = vunpack.c.l.b16 %v204
    %v598 = vunpack.c.h.b16 %v204
    %v599 = vunpack.c.l.b16 %v205
    %v600 = vunpack.c.h.b16 %v205
    %v601 = vunpack.c.l.b16 %v206
    %v602 = vunpack.c.h.b16 %v206
    %v603 = vunpack.c.l.b16 %v207
    %v604 = vunpack.c.h.b16 %v207
    %v605 = vunpack.c.l.b16 %v208
    %v606 = vunpack.c.h.b16 %v208
    %v607 = vunpack.c.l.b16 %v209
    %v608 = vunpack.c.h.b16 %v209
    %v609 = vunpack.c.l.b16 %v210
    %v610 = vunpack.c.h.b16 %v210
    %v611 = vunpack.c.l.b16 %v211
    %v612 = vunpack.c.h.b16 %v211
    %v613 = vunpack.c.l.b16 %v212
    %v614 = vunpack.c.h.b16 %v212
    %v615 = vunpack.c.l.b16 %v213
    %v616 = vunpack.c.h.b16 %v213
    %v617 = vunpack.c.l.b16 %v214
    %v618 = vunpack.c.h.b16 %v214
    %v619 = vpack.c.b16 %v367, %v363
    %v620 = vpack.c.b16 %v368, %v364
    %v621 = vpack.c.b16 %v369, %v365
    %v622 = vpack.c.b16 %v370, %v366
    %v623 = vpack.c.b16 %v375, %v371
    %v624 = vpack.c.b16 %v376, %v372
    %v625 = vpack.c.b16 %v377, %v373
    %v626 = vpack.c.b16 %v378, %v374
    %v627 = vpack.c.b16 %v383, %v379
    %v628 = vpack.c.b16 %v384, %v380
    %v629 = vpack.c.b16 %v385, %v381
    %v630 = vpack.c.b16 %v386, %v382
    %v631 = vpack.c.b16 %v391, %v387
    %v632 = vpack.c.b16 %v392, %v388
    %v633 = vpack.c.b16 %v393, %v389
    %v634 = vpack.c.b16 %v394, %v390
    %v635 = vpack.c.b16 %v399, %v395
    %v636 = vpack.c.b16 %v400, %v396
    %v637 = vpack.c.b16 %v401, %v397
    %v638 = vpack.c.b16 %v402, %v398
    %v639 = vpack.c.b16 %v407, %v403
    %v640 = vpack.c.b16 %v408, %v404
    %v641 = vpack.c.b16 %v409, %v405
    %v642 = vpack.c.b16 %v410, %v406
    %v643 = vpack.c.b16 %v415, %v411
    %v644 = vpack.c.b16 %v416, %v412
    %v645 = vpack.c.b16 %v417, %v413
    %v646 = vpack.c.b16 %v418, %v414
    %v647 = vpack.c.b16 %v423, %v419
    %v648 = vpack.c.b16 %v424, %v420
    %v649 = vpack.c.b16 %v425, %v421
    %v650 = vpack.c.b16 %v426, %v422
    %v651 = vpack.c.b16 %v431, %v427
    %v652 = vpack.c.b16 %v432, %v428
    %v653 = vpack.c.b16 %v433, %v429
    %v654 = vpack.c.b16 %v434, %v430
    %v655 = vpack.c.b16 %v439, %v435
    %v656 = vpack.c.b16 %v440, %v436
    %v657 = vpack.c.b16 %v441, %v437
    %v658 = vpack.c.b16 %v442, %v438
    %v659 = vpack.c.b16 %v447, %v443
    %v660 = vpack.c.b16 %v448, %v444
    %v661 = vpack.c.b16 %v449, %v445
    %v662 = vpack.c.b16 %v450, %v446
    %v663 = vpack.c.b16 %v455, %v451
    %v664 = vpack.c.b16 %v456, %v452
    %v665 = vpack.c.b16 %v457, %v453
    %v666 = vpack.c.b16 %v458, %v454
    %v667 = vpack.c.b16 %v463, %v459
    %v668 = vpack.c.b16 %v464, %v460
    %v669 = vpack.c.b16 %v465, %v461
    %v670 = vpack.c.b16 %v466, %v462
    %v671 = vpack.c.b16 %v471, %v467
    %v672 = vpack.c.b16 %v472, %v468
    %v673 = vpack.c.b16 %v473, %v469
    %v674 = vpack.c.b16 %v474, %v470
    %v675 = vpack.c.b16 %v479, %v475
    %v676 = vpack.c.b16 %v480, %v476
    %v677 = vpack.c.b16 %v481, %v477
    %v678 = vpack.c.b16 %v482, %v478
    %v679 = vpack.c.b16 %v487, %v483
    %v680 = vpack.c.b16 %v488, %v484
    %v681 = vpack.c.b16 %v489, %v485
    %v682 = vpack.c.b16 %v490, %v486
    %v683 = vpack.c.b16 %v495, %v491
    %v684 = vpack.c.b16 %v496, %v492
    %v685 = vpack.c.b16 %v497, %v493
    %v686 = vpack.c.b16 %v498, %v494
    %v687 = vpack.c.b16 %v503, %v499
    %v688 = vpack.c.b16 %v504, %v500
    %v689 = vpack.c.b16 %v505, %v501
    %v690 = vpack.c.b16 %v506, %v502
    %v691 = vpack.c.b16 %v511, %v507
    %v692 = vpack.c.b16 %v512, %v508
    %v693 = vpack.c.b16 %v513, %v509
    %v694 = vpack.c.b16 %v514, %v510
    %v695 = vpack.c.b16 %v519, %v515
    %v696 = vpack.c.b16 %v520, %v516
    %v697 = vpack.c.b16 %v521, %v517
    %v698 = vpack.c.b16 %v522, %v518
    %v699 = vpack.c.b16 %v527, %v523
    %v700 = vpack.c.b16 %v528, %v524
    %v701 = vpack.c.b16 %v529, %v525
    %v702 = vpack.c.b16 %v530, %v526
    %v703 = vpack.c.b16 %v535, %v531
    %v704 = vpack.c.b16 %v536, %v532
    %v705 = vpack.c.b16 %v537, %v533
    %v706 = vpack.c.b16 %v538, %v534
    %v707 = vpack.c.b16 %v543, %v539
    %v708 = vpack.c.b16 %v544, %v540
    %v709 = vpack.c.b16 %v545, %v541
    %v710 = vpack.c.b16 %v546, %v542
    %v711 = vpack.c.b16 %v551, %v547
    %v712 = vpack.c.b16 %v552, %v548
    %v713 = vpack.c.b16 %v553, %v549
    %v714 = vpack.c.b16 %v554, %v550
    %v715 = vpack.c.b16 %v559, %v555
    %v716 = vpack.c.b16 %v560, %v556
    %v717 = vpack.c.b16 %v561, %v557
    %v718 = vpack.c.b16 %v562, %v558
    %v719 = vpack.c.b16 %v567, %v563
    %v720 = vpack.c.b16 %v568, %v564
    %v721 = vpack.c.b16 %v569, %v565
    %v722 = vpack.c.b16 %v570, %v566
    %v723 = vpack.c.b16 %v575, %v571
    %v724 = vpack.c.b16 %v576, %v572
    %v725 = vpack.c.b16 %v577, %v573
    %v726 = vpack.c.b16 %v578, %v574
    %v727 = vpack.c.b16 %v583, %v579
    %v728 = vpack.c.b16 %v584, %v580
    %v729 = vpack.c.b16 %v585, %v581
    %v730 = vpack.c.b16 %v586, %v582
    %v731 = vpack.c.b16 %v591, %v587
    %v732 = vpack.c.b16 %v592, %v588
    %v733 = vpack.c.b16 %v593, %v589
    %v734 = vpack.c.b16 %v594, %v590
    %v735 = vpack.c.b16 %v599, %v595
    %v736 = vpack.c.b16 %v600, %v596
    %v737 = vpack.c.b16 %v601, %v597
    %v738 = vpack.c.b16 %v602, %v598
    %v739 = vpack.c.b16 %v607, %v603
    %v740 = vpack.c.b16 %v608, %v604
    %v741 = vpack.c.b16 %v609, %v605
    %v742 = vpack.c.b16 %v610, %v606
    %v743 = vpack.c.b16 %v615, %v611
    %v744 = vpack.c.b16 %v616, %v612
    %v745 = vpack.c.b16 %v617, %v613
    %v746 = vpack.c.b16 %v618, %v614
    %875 = vmatprep.subr.bf16.mxu0 %v620
    %876 = vmatpush1.bf16.msra.mxu0 %v619
    %877 = vmatprep.subr.bf16.mxu0 %v624
    %878 = vmatpush1.bf16.msra.mxu0 %v623
    %879 = vmatprep.subr.bf16.mxu0 %v628
    %880 = vmatpush1.bf16.msra.mxu0 %v627
    %881 = vmatprep.subr.bf16.mxu0 %v632
    %882 = vmatpush1.bf16.msra.mxu0 %v631
    %883 = vmatprep.subr.bf16.mxu0 %v636
    %884 = vmatpush1.bf16.msra.mxu0 %v635
    %885 = vmatprep.subr.bf16.mxu0 %v640
    %886 = vmatpush1.bf16.msra.mxu0 %v639
    %887 = vmatprep.subr.bf16.mxu0 %v644
    %888 = vmatpush1.bf16.msra.mxu0 %v643
    %889 = vmatprep.subr.bf16.mxu0 %v648
    %890 = vmatpush1.bf16.msra.mxu0 %v647
    %891 = vmatprep.subr.bf16.mxu0 %v652
    %892 = vmatpush1.bf16.msra.mxu0 %v651
    %893 = vmatprep.subr.bf16.mxu0 %v656
    %894 = vmatpush1.bf16.msra.mxu0 %v655
    %895 = vmatprep.subr.bf16.mxu0 %v660
    %896 = vmatpush1.bf16.msra.mxu0 %v659
    %897 = vmatprep.subr.bf16.mxu0 %v664
    %898 = vmatpush1.bf16.msra.mxu0 %v663
    %899 = vmatprep.subr.bf16.mxu0 %v668
    %900 = vmatpush1.bf16.msra.mxu0 %v667
    %901 = vmatprep.subr.bf16.mxu0 %v672
    %902 = vmatpush1.bf16.msra.mxu0 %v671
    %903 = vmatprep.subr.bf16.mxu0 %v676
    %904 = vmatpush1.bf16.msra.mxu0 %v675
    %905 = vmatprep.subr.bf16.mxu0 %v680
    %906 = vmatpush1.bf16.msra.mxu0 %v679
    %907 = vmatprep.mubr.bf16.mxu0 %v228
    %908 = vmatmul.mubr.bf16.gmra.mrb[0].mxu0 %v227
    %v909 = vpop.f32.mrb[0].mxu0
    %v910 = vadd.f32 0.0, %v909
    %v911 = vpop.f32.mrb[0].mxu0
    %v912 = vadd.f32 0.0, %v911
    %v913 = vpop.f32.mrb[0].mxu0
    %v914 = vadd.f32 0.0, %v913
    %v915 = vpop.f32.mrb[0].mxu0
    %v916 = vadd.f32 0.0, %v915
    %917 = vdwg.mxu0
    %918 = vmatprep.subr.bf16.mxu0 %v684
    %919 = vmatpush1.bf16.msra.mxu0 %v683
    %920 = vmatprep.subr.bf16.mxu0 %v688
    %921 = vmatpush1.bf16.msra.mxu0 %v687
    %922 = vmatprep.subr.bf16.mxu0 %v692
    %923 = vmatpush1.bf16.msra.mxu0 %v691
    %924 = vmatprep.subr.bf16.mxu0 %v696
    %925 = vmatpush1.bf16.msra.mxu0 %v695
    %926 = vmatprep.subr.bf16.mxu0 %v700
    %927 = vmatpush1.bf16.msra.mxu0 %v699
    %928 = vmatprep.subr.bf16.mxu0 %v704
    %929 = vmatpush1.bf16.msra.mxu0 %v703
    %930 = vmatprep.subr.bf16.mxu0 %v708
    %931 = vmatpush1.bf16.msra.mxu0 %v707
    %932 = vmatprep.subr.bf16.mxu0 %v712
    %933 = vmatpush1.bf16.msra.mxu0 %v711
    %934 = vmatprep.subr.bf16.mxu0 %v716
    %935 = vmatpush1.bf16.msra.mxu0 %v715
    %936 = vmatprep.subr.bf16.mxu0 %v720
    %937 = vmatpush1.bf16.msra.mxu0 %v719
    %938 = vmatprep.subr.bf16.mxu0 %v724
    %939 = vmatpush1.bf16.msra.mxu0 %v723
    %940 = vmatprep.subr.bf16.mxu0 %v728
    %941 = vmatpush1.bf16.msra.mxu0 %v727
    %942 = vmatprep.subr.bf16.mxu0 %v732
    %943 = vmatpush1.bf16.msra.mxu0 %v731
    %944 = vmatprep.subr.bf16.mxu0 %v736
    %945 = vmatpush1.bf16.msra.mxu0 %v735
    %946 = vmatprep.subr.bf16.mxu0 %v740
    %947 = vmatpush1.bf16.msra.mxu0 %v739
    %948 = vmatprep.subr.bf16.mxu0 %v744
    %949 = vmatpush1.bf16.msra.mxu0 %v743
    %950 = vmatprep.mubr.bf16.mxu0 %v230
    %951 = vmatmul.mubr.bf16.gmra.mrb[0].mxu0 %v229
    %v952 = vpop.f32.mrb[0].mxu0
    %v953 = vadd.f32 %v910, %v952
    %v954 = vpop.f32.mrb[0].mxu0
    %v955 = vadd.f32 %v912, %v954
    %v956 = vpop.f32.mrb[0].mxu0
    %v957 = vadd.f32 %v914, %v956
    %v958 = vpop.f32.mrb[0].mxu0
    %v959 = vadd.f32 %v916, %v958
    %960 = vdwg.mxu0
    %961 = vmatprep.subr.bf16.mxu0 %v622
    %962 = vmatpush1.bf16.msra.mxu0 %v621
    %963 = vmatprep.subr.bf16.mxu0 %v626
    %964 = vmatpush1.bf16.msra.mxu0 %v625
    %965 = vmatprep.subr.bf16.mxu0 %v630
    %966 = vmatpush1.bf16.msra.mxu0 %v629
    %967 = vmatprep.subr.bf16.mxu0 %v634
    %968 = vmatpush1.bf16.msra.mxu0 %v633
    %969 = vmatprep.subr.bf16.mxu0 %v638
    %970 = vmatpush1.bf16.msra.mxu0 %v637
    %971 = vmatprep.subr.bf16.mxu0 %v642
    %972 = vmatpush1.bf16.msra.mxu0 %v641
    %973 = vmatprep.subr.bf16.mxu0 %v646
    %974 = vmatpush1.bf16.msra.mxu0 %v645
    %975 = vmatprep.subr.bf16.mxu0 %v650
    %976 = vmatpush1.bf16.msra.mxu0 %v649
    %977 = vmatprep.subr.bf16.mxu0 %v654
    %978 = vmatpush1.bf16.msra.mxu0 %v653
    %979 = vmatprep.subr.bf16.mxu0 %v658
    %980 = vmatpush1.bf16.msra.mxu0 %v657
    %981 = vmatprep.subr.bf16.mxu0 %v662
    %982 = vmatpush1.bf16.msra.mxu0 %v661
    %983 = vmatprep.subr.bf16.mxu0 %v666
    %984 = vmatpush1.bf16.msra.mxu0 %v665
    %985 = vmatprep.subr.bf16.mxu0 %v670
    %986 = vmatpush1.bf16.msra.mxu0 %v669
    %987 = vmatprep.subr.bf16.mxu0 %v674
    %988 = vmatpush1.bf16.msra.mxu0 %v673
    %989 = vmatprep.subr.bf16.mxu0 %v678
    %990 = vmatpush1.bf16.msra.mxu0 %v677
    %991 = vmatprep.subr.bf16.mxu0 %v682
    %992 = vmatpush1.bf16.msra.mxu0 %v681
    %993 = vmatprep.mubr.bf16.mxu0 %v228
    %994 = vmatmul.mubr.bf16.gmra.mrb[0].mxu0 %v227
    %v995 = vpop.f32.mrb[0].mxu0
    %v996 = vadd.f32 0.0, %v995
    %v997 = vpop.f32.mrb[0].mxu0
    %v998 = vadd.f32 0.0, %v997
    %v999 = vpop.f32.mrb[0].mxu0
    %v1000 = vadd.f32 0.0, %v999
    %v1001 = vpop.f32.mrb[0].mxu0
    %v1002 = vadd.f32 0.0, %v1001
    %1003 = vdwg.mxu0
    %1004 = vmatprep.subr.bf16.mxu0 %v686
    %1005 = vmatpush1.bf16.msra.mxu0 %v685
    %1006 = vmatprep.subr.bf16.mxu0 %v690
    %1007 = vmatpush1.bf16.msra.mxu0 %v689
    %1008 = vmatprep.subr.bf16.mxu0 %v694
    %1009 = vmatpush1.bf16.msra.mxu0 %v693
    %1010 = vmatprep.subr.bf16.mxu0 %v698
    %1011 = vmatpush1.bf16.msra.mxu0 %v697
    %1012 = vmatprep.subr.bf16.mxu0 %v702
    %1013 = vmatpush1.bf16.msra.mxu0 %v701
    %1014 = vmatprep.subr.bf16.mxu0 %v706
    %1015 = vmatpush1.bf16.msra.mxu0 %v705
    %1016 = vmatprep.subr.bf16.mxu0 %v710
    %1017 = vmatpush1.bf16.msra.mxu0 %v709
    %1018 = vmatprep.subr.bf16.mxu0 %v714
    %1019 = vmatpush1.bf16.msra.mxu0 %v713
    %1020 = vmatprep.subr.bf16.mxu0 %v718
    %1021 = vmatpush1.bf16.msra.mxu0 %v717
    %1022 = vmatprep.subr.bf16.mxu0 %v722
    %1023 = vmatpush1.bf16.msra.mxu0 %v721
    %1024 = vmatprep.subr.bf16.mxu0 %v726
    %1025 = vmatpush1.bf16.msra.mxu0 %v725
    %1026 = vmatprep.subr.bf16.mxu0 %v730
    %1027 = vmatpush1.bf16.msra.mxu0 %v729
    %1028 = vmatprep.subr.bf16.mxu0 %v734
    %1029 = vmatpush1.bf16.msra.mxu0 %v733
    %1030 = vmatprep.subr.bf16.mxu0 %v738
    %1031 = vmatpush1.bf16.msra.mxu0 %v737
    %1032 = vmatprep.subr.bf16.mxu0 %v742
    %1033 = vmatpush1.bf16.msra.mxu0 %v741
    %1034 = vmatprep.subr.bf16.mxu0 %v746
    %1035 = vmatpush1.bf16.msra.mxu0 %v745
    %1036 = vmatprep.mubr.bf16.mxu0 %v230
    %1037 = vmatmul.mubr.bf16.gmra.mrb[0].mxu0 %v229
    %v1038 = vpop.f32.mrb[0].mxu0
    %v1039 = vadd.f32 %v996, %v1038
    %v1040 = vpop.f32.mrb[0].mxu0
    %v1041 = vadd.f32 %v998, %v1040
    %v1042 = vpop.f32.mrb[0].mxu0
    %v1043 = vadd.f32 %v1000, %v1042
    %v1044 = vpop.f32.mrb[0].mxu0
    %v1045 = vadd.f32 %v1002, %v1044
    %1046 = vdwg.mxu0
    %v1047 = vadd.f32 %v75, %v953
    %v1048 = vadd.f32 %v76, %v955
    %v1049 = vadd.f32 %v77, %v1039
    %v1050 = vadd.f32 %v78, %v1041
    %v1051 = vadd.f32 %v79, %v957
    %v1052 = vadd.f32 %v80, %v959
    %v1053 = vadd.f32 %v81, %v1043
    %v1054 = vadd.f32 %v82, %v1045
    %1055 = vst [vmem:[#allocation2] sm:$0xff] %v1047
    %1056 = vst [vmem:[#allocation2 + $0x8] sm:$0xff] %v1048
    %1057 = vst [vmem:[#allocation2 + $0x10] sm:$0xff] %v1049
    %1058 = vst [vmem:[#allocation2 + $0x18] sm:$0xff] %v1050
    %1059 = vst [vmem:[#allocation2 + $0x20] sm:$0xff] %v1051
    %1060 = vst [vmem:[#allocation2 + $0x28] sm:$0xff] %v1052
    %1061 = vst [vmem:[#allocation2 + $0x30] sm:$0xff] %v1053
    %1062 = vst [vmem:[#allocation2 + $0x38] sm:$0xff] %v1054
    // Predicated region
    $region38: #{tpu_custom_call.1} parent=1 // pred_check
      %p1063 = pneg %p63
    $region39: #{tpu_custom_call.1} parent=1 // pred_check_branch
      %1065 = sbr.rel (%p1063) target = $region41
    $region40: #{tpu_custom_call.1} parent=1 // pred_region
      %v1066 = vld [vmem:[#allocation2] sm:$0xff]
      %v1067 = vld [vmem:[#allocation2 + $0x8] sm:$0xff]
      %v1068 = vld [vmem:[#allocation2 + $0x10] sm:$0xff]
      %v1069 = vld [vmem:[#allocation2 + $0x18] sm:$0xff]
      %v1070 = vld [vmem:[#allocation2 + $0x20] sm:$0xff]
      %v1071 = vld [vmem:[#allocation2 + $0x28] sm:$0xff]
      %v1072 = vld [vmem:[#allocation2 + $0x30] sm:$0xff]
      %v1073 = vld [vmem:[#allocation2 + $0x38] sm:$0xff]
      %v1074 = vld [vmem:[%s2] sm:$0xf]
      %v1076 = vlaneseq
      %v1077 = vshrl.u32 %v1076, 7
      %v1078 = vsub.s32 0, %v1077
      %v1079 = vrot.slane %v1074, %v1078
      %v1080 = vlaneseq
      %v1081 = vshrl.u32 %v1080, 7
      %v1082 = vsub.s32 1, %v1081
      %v1083 = vrot.slane %v1074, %v1082
      %v1084 = vlaneseq
      %v1085 = vshrl.u32 %v1084, 7
      %v1086 = vsub.s32 2, %v1085
      %v1087 = vrot.slane %v1074, %v1086
      %v1088 = vlaneseq
      %v1089 = vshrl.u32 %v1088, 7
      %v1090 = vsub.s32 3, %v1089
      %v1091 = vrot.slane %v1074, %v1090
      %v1096 = vadd.f32 %v1066, %v1079
      %v1097 = vadd.f32 %v1067, %v1083
      %v1098 = vadd.f32 %v1068, %v1087
      %v1099 = vadd.f32 %v1069, %v1091
      %v1100 = vadd.f32 %v1070, %v1079
      %v1101 = vadd.f32 %v1071, %v1083
      %v1102 = vadd.f32 %v1072, %v1087
      %v1103 = vadd.f32 %v1073, %v1091
      %v1104 = vmul.f32 %v1096, 0.01
      %v1105 = vmul.f32 %v1097, 0.01
      %v1106 = vmul.f32 %v1098, 0.01
      %v1107 = vmul.f32 %v1099, 0.01
      %v1108 = vmul.f32 %v1100, 0.01
      %v1109 = vmul.f32 %v1101, 0.01
      %v1110 = vmul.f32 %v1102, 0.01
      %v1111 = vmul.f32 %v1103, 0.01
      %v1112 = vmax.f32 %v1096, %v1104
      %v1113 = vmax.f32 %v1097, %v1105
      %v1114 = vmax.f32 %v1098, %v1106
      %v1115 = vmax.f32 %v1099, %v1107
      %v1116 = vmax.f32 %v1100, %v1108
      %v1117 = vmax.f32 %v1101, %v1109
      %v1118 = vmax.f32 %v1102, %v1110
      %v1119 = vmax.f32 %v1103, %v1111
      %v1120 = vpack.c.bf16 %v1116, %v1112
      %v1121 = vpack.c.bf16 %v1117, %v1113
      %v1122 = vpack.c.bf16 %v1118, %v1114
      %v1123 = vpack.c.bf16 %v1119, %v1115
      %v1124 = vld [vmem:[#allocation8] sm:$0xf]
      %v1125 = vld [vmem:[#allocation8 + $0x4] sm:$0xf]
      %v1126 = vld [vmem:[#allocation8 + $0x8] sm:$0xf]
      %v1127 = vld [vmem:[#allocation8 + $0xc] sm:$0xf]
      %v1128 = vld [vmem:[#allocation8 + $0x10] sm:$0xf]
      %v1129 = vld [vmem:[#allocation8 + $0x14] sm:$0xf]
      %v1130 = vld [vmem:[#allocation8 + $0x18] sm:$0xf]
      %v1131 = vld [vmem:[#allocation8 + $0x1c] sm:$0xf]
      %v1132 = vld [vmem:[#allocation8 + $0x20] sm:$0xf]
      %v1133 = vld [vmem:[#allocation8 + $0x24] sm:$0xf]
      %v1134 = vld [vmem:[#allocation8 + $0x28] sm:$0xf]
      %v1135 = vld [vmem:[#allocation8 + $0x2c] sm:$0xf]
      %v1136 = vld [vmem:[#allocation8 + $0x30] sm:$0xf]
      %v1137 = vld [vmem:[#allocation8 + $0x34] sm:$0xf]
      %v1138 = vld [vmem:[#allocation8 + $0x38] sm:$0xf]
      %v1139 = vld [vmem:[#allocation8 + $0x3c] sm:$0xf]
      %v1140 = vld [vmem:[#allocation8 + $0x40] sm:$0xf]
      %v1141 = vld [vmem:[#allocation8 + $0x44] sm:$0xf]
      %v1142 = vld [vmem:[#allocation8 + $0x48] sm:$0xf]
      %v1143 = vld [vmem:[#allocation8 + $0x4c] sm:$0xf]
      %v1144 = vld [vmem:[#allocation8 + $0x50] sm:$0xf]
      %v1145 = vld [vmem:[#allocation8 + $0x54] sm:$0xf]
      %v1146 = vld [vmem:[#allocation8 + $0x58] sm:$0xf]
      %v1147 = vld [vmem:[#allocation8 + $0x5c] sm:$0xf]
      %v1148 = vld [vmem:[#allocation8 + $0x60] sm:$0xf]
      %v1149 = vld [vmem:[#allocation8 + $0x64] sm:$0xf]
      %v1150 = vld [vmem:[#allocation8 + $0x68] sm:$0xf]
      %v1151 = vld [vmem:[#allocation8 + $0x6c] sm:$0xf]
      %v1152 = vld [vmem:[#allocation8 + $0x70] sm:$0xf]
      %v1153 = vld [vmem:[#allocation8 + $0x74] sm:$0xf]
      %v1154 = vld [vmem:[#allocation8 + $0x78] sm:$0xf]
      %v1155 = vld [vmem:[#allocation8 + $0x7c] sm:$0xf]
      %v1156 = vld [vmem:[#allocation8 + $0x80] sm:$0xf]
      %v1157 = vld [vmem:[#allocation8 + $0x84] sm:$0xf]
      %v1158 = vld [vmem:[#allocation8 + $0x88] sm:$0xf]
      %v1159 = vld [vmem:[#allocation8 + $0x8c] sm:$0xf]
      %v1160 = vld [vmem:[#allocation8 + $0x90] sm:$0xf]
      %v1161 = vld [vmem:[#allocation8 + $0x94] sm:$0xf]
      %v1162 = vld [vmem:[#allocation8 + $0x98] sm:$0xf]
      %v1163 = vld [vmem:[#allocation8 + $0x9c] sm:$0xf]
      %v1164 = vld [vmem:[#allocation8 + $0xa0] sm:$0xf]
      %v1165 = vld [vmem:[#allocation8 + $0xa4] sm:$0xf]
      %v1166 = vld [vmem:[#allocation8 + $0xa8] sm:$0xf]
      %v1167 = vld [vmem:[#allocation8 + $0xac] sm:$0xf]
      %v1168 = vld [vmem:[#allocation8 + $0xb0] sm:$0xf]
      %v1169 = vld [vmem:[#allocation8 + $0xb4] sm:$0xf]
      %v1170 = vld [vmem:[#allocation8 + $0xb8] sm:$0xf]
      %v1171 = vld [vmem:[#allocation8 + $0xbc] sm:$0xf]
      %v1172 = vld [vmem:[#allocation8 + $0xc0] sm:$0xf]
      %v1173 = vld [vmem:[#allocation8 + $0xc4] sm:$0xf]
      %v1174 = vld [vmem:[#allocation8 + $0xc8] sm:$0xf]
      %v1175 = vld [vmem:[#allocation8 + $0xcc] sm:$0xf]
      %v1176 = vld [vmem:[#allocation8 + $0xd0] sm:$0xf]
      %v1177 = vld [vmem:[#allocation8 + $0xd4] sm:$0xf]
      %v1178 = vld [vmem:[#allocation8 + $0xd8] sm:$0xf]
      %v1179 = vld [vmem:[#allocation8 + $0xdc] sm:$0xf]
      %v1180 = vld [vmem:[#allocation8 + $0xe0] sm:$0xf]
      %v1181 = vld [vmem:[#allocation8 + $0xe4] sm:$0xf]
      %v1182 = vld [vmem:[#allocation8 + $0xe8] sm:$0xf]
      %v1183 = vld [vmem:[#allocation8 + $0xec] sm:$0xf]
      %v1184 = vld [vmem:[#allocation8 + $0xf0] sm:$0xf]
      %v1185 = vld [vmem:[#allocation8 + $0xf4] sm:$0xf]
      %v1186 = vld [vmem:[#allocation8 + $0xf8] sm:$0xf]
      %v1187 = vld [vmem:[#allocation8 + $0xfc] sm:$0xf]
      %v1188 = vld [vmem:[%s4] sm:$0x1]
      %v1190 = vlaneseq
      %v1191 = vshrl.u32 %v1190, 7
      %v1192 = vsub.s32 0, %v1191
      %v1193 = vrot.slane %v1188, %v1192
      %v1259 = vunpack.c.l.b16 %v1124
      %v1260 = vunpack.c.l.b16 %v1125
      %v1261 = vunpack.c.l.b16 %v1126
      %v1262 = vunpack.c.l.b16 %v1127
      %v1263 = vunpack.c.l.b16 %v1128
      %v1264 = vunpack.c.l.b16 %v1129
      %v1265 = vunpack.c.l.b16 %v1130
      %v1266 = vunpack.c.l.b16 %v1131
      %v1267 = vunpack.c.l.b16 %v1132
      %v1268 = vunpack.c.l.b16 %v1133
      %v1269 = vunpack.c.l.b16 %v1134
      %v1270 = vunpack.c.l.b16 %v1135
      %v1271 = vunpack.c.l.b16 %v1136
      %v1272 = vunpack.c.l.b16 %v1137
      %v1273 = vunpack.c.l.b16 %v1138
      %v1274 = vunpack.c.l.b16 %v1139
      %v1275 = vunpack.c.l.b16 %v1140
      %v1276 = vunpack.c.l.b16 %v1141
      %v1277 = vunpack.c.l.b16 %v1142
      %v1278 = vunpack.c.l.b16 %v1143
      %v1279 = vunpack.c.l.b16 %v1144
      %v1280 = vunpack.c.l.b16 %v1145
      %v1281 = vunpack.c.l.b16 %v1146
      %v1282 = vunpack.c.l.b16 %v1147
      %v1283 = vunpack.c.l.b16 %v1148
      %v1284 = vunpack.c.l.b16 %v1149
      %v1285 = vunpack.c.l.b16 %v1150
      %v1286 = vunpack.c.l.b16 %v1151
      %v1287 = vunpack.c.l.b16 %v1152
      %v1288 = vunpack.c.l.b16 %v1153
      %v1289 = vunpack.c.l.b16 %v1154
      %v1290 = vunpack.c.l.b16 %v1155
      %v1291 = vunpack.c.l.b16 %v1156
      %v1292 = vunpack.c.l.b16 %v1157
      %v1293 = vunpack.c.l.b16 %v1158
      %v1294 = vunpack.c.l.b16 %v1159
      %v1295 = vunpack.c.l.b16 %v1160
      %v1296 = vunpack.c.l.b16 %v1161
      %v1297 = vunpack.c.l.b16 %v1162
      %v1298 = vunpack.c.l.b16 %v1163
      %v1299 = vunpack.c.l.b16 %v1164
      %v1300 = vunpack.c.l.b16 %v1165
      %v1301 = vunpack.c.l.b16 %v1166
      %v1302 = vunpack.c.l.b16 %v1167
      %v1303 = vunpack.c.l.b16 %v1168
      %v1304 = vunpack.c.l.b16 %v1169
      %v1305 = vunpack.c.l.b16 %v1170
      %v1306 = vunpack.c.l.b16 %v1171
      %v1307 = vunpack.c.l.b16 %v1172
      %v1308 = vunpack.c.l.b16 %v1173
      %v1309 = vunpack.c.l.b16 %v1174
      %v1310 = vunpack.c.l.b16 %v1175
      %v1311 = vunpack.c.l.b16 %v1176
      %v1312 = vunpack.c.l.b16 %v1177
      %v1313 = vunpack.c.l.b16 %v1178
      %v1314 = vunpack.c.l.b16 %v1179
      %v1315 = vunpack.c.l.b16 %v1180
      %v1316 = vunpack.c.l.b16 %v1181
      %v1317 = vunpack.c.l.b16 %v1182
      %v1318 = vunpack.c.l.b16 %v1183
      %v1319 = vunpack.c.l.b16 %v1184
      %v1320 = vunpack.c.l.b16 %v1185
      %v1321 = vunpack.c.l.b16 %v1186
      %v1322 = vunpack.c.l.b16 %v1187
      %v1323 = vpack.c.b16 %v1260, %v1259
      %v1324 = vpack.c.b16 %v1262, %v1261
      %v1325 = vpack.c.b16 %v1264, %v1263
      %v1326 = vpack.c.b16 %v1266, %v1265
      %v1327 = vpack.c.b16 %v1268, %v1267
      %v1328 = vpack.c.b16 %v1270, %v1269
      %v1329 = vpack.c.b16 %v1272, %v1271
      %v1330 = vpack.c.b16 %v1274, %v1273
      %v1331 = vpack.c.b16 %v1276, %v1275
      %v1332 = vpack.c.b16 %v1278, %v1277
      %v1333 = vpack.c.b16 %v1280, %v1279
      %v1334 = vpack.c.b16 %v1282, %v1281
      %v1335 = vpack.c.b16 %v1284, %v1283
      %v1336 = vpack.c.b16 %v1286, %v1285
      %v1337 = vpack.c.b16 %v1288, %v1287
      %v1338 = vpack.c.b16 %v1290, %v1289
      %v1339 = vpack.c.b16 %v1292, %v1291
      %v1340 = vpack.c.b16 %v1294, %v1293
      %v1341 = vpack.c.b16 %v1296, %v1295
      %v1342 = vpack.c.b16 %v1298, %v1297
      %v1343 = vpack.c.b16 %v1300, %v1299
      %v1344 = vpack.c.b16 %v1302, %v1301
      %v1345 = vpack.c.b16 %v1304, %v1303
      %v1346 = vpack.c.b16 %v1306, %v1305
      %v1347 = vpack.c.b16 %v1308, %v1307
      %v1348 = vpack.c.b16 %v1310, %v1309
      %v1349 = vpack.c.b16 %v1312, %v1311
      %v1350 = vpack.c.b16 %v1314, %v1313
      %v1351 = vpack.c.b16 %v1316, %v1315
      %v1352 = vpack.c.b16 %v1318, %v1317
      %v1353 = vpack.c.b16 %v1320, %v1319
      %v1354 = vpack.c.b16 %v1322, %v1321
      %1387 = vmatprep.subr.bf16.mxu0 0
      %1388 = vmatpush1.bf16.msra.mxu0 %v1323
      %1389 = vmatprep.subr.bf16.mxu0 0
      %1390 = vmatpush1.bf16.msra.mxu0 %v1324
      %1391 = vmatprep.subr.bf16.mxu0 0
      %1392 = vmatpush1.bf16.msra.mxu0 %v1325
      %1393 = vmatprep.subr.bf16.mxu0 0
      %1394 = vmatpush1.bf16.msra.mxu0 %v1326
      %1395 = vmatprep.subr.bf16.mxu0 0
      %1396 = vmatpush1.bf16.msra.mxu0 %v1327
      %1397 = vmatprep.subr.bf16.mxu0 0
      %1398 = vmatpush1.bf16.msra.mxu0 %v1328
      %1399 = vmatprep.subr.bf16.mxu0 0
      %1400 = vmatpush1.bf16.msra.mxu0 %v1329
      %1401 = vmatprep.subr.bf16.mxu0 0
      %1402 = vmatpush1.bf16.msra.mxu0 %v1330
      %1403 = vmatprep.subr.bf16.mxu0 0
      %1404 = vmatpush1.bf16.msra.mxu0 %v1331
      %1405 = vmatprep.subr.bf16.mxu0 0
      %1406 = vmatpush1.bf16.msra.mxu0 %v1332
      %1407 = vmatprep.subr.bf16.mxu0 0
      %1408 = vmatpush1.bf16.msra.mxu0 %v1333
      %1409 = vmatprep.subr.bf16.mxu0 0
      %1410 = vmatpush1.bf16.msra.mxu0 %v1334
      %1411 = vmatprep.subr.bf16.mxu0 0
      %1412 = vmatpush1.bf16.msra.mxu0 %v1335
      %1413 = vmatprep.subr.bf16.mxu0 0
      %1414 = vmatpush1.bf16.msra.mxu0 %v1336
      %1415 = vmatprep.subr.bf16.mxu0 0
      %1416 = vmatpush1.bf16.msra.mxu0 %v1337
      %1417 = vmatprep.subr.bf16.mxu0 0
      %1418 = vmatpush1.bf16.msra.mxu0 %v1338
      %1419 = vmatprep.mubr.bf16.mxu0 %v1121
      %1420 = vmatmul.mubr.bf16.gmra.mrb[0].mxu0 %v1120
      %v1421 = vpop.f32.mrb[0].mxu0
      %v1422 = vadd.f32 %v1193, %v1421
      %v1423 = vpop.f32.mrb[0].mxu0
      %v1424 = vpop.f32.mrb[0].mxu0
      %v1425 = vadd.f32 %v1193, %v1424
      %v1426 = vpop.f32.mrb[0].mxu0
      %1427 = vdwg.mxu0
      %1428 = vmatprep.subr.bf16.mxu0 0
      %1429 = vmatpush1.bf16.msra.mxu0 %v1339
      %1430 = vmatprep.subr.bf16.mxu0 0
      %1431 = vmatpush1.bf16.msra.mxu0 %v1340
      %1432 = vmatprep.subr.bf16.mxu0 0
      %1433 = vmatpush1.bf16.msra.mxu0 %v1341
      %1434 = vmatprep.subr.bf16.mxu0 0
      %1435 = vmatpush1.bf16.msra.mxu0 %v1342
      %1436 = vmatprep.subr.bf16.mxu0 0
      %1437 = vmatpush1.bf16.msra.mxu0 %v1343
      %1438 = vmatprep.subr.bf16.mxu0 0
      %1439 = vmatpush1.bf16.msra.mxu0 %v1344
      %1440 = vmatprep.subr.bf16.mxu0 0
      %1441 = vmatpush1.bf16.msra.mxu0 %v1345
      %1442 = vmatprep.subr.bf16.mxu0 0
      %1443 = vmatpush1.bf16.msra.mxu0 %v1346
      %1444 = vmatprep.subr.bf16.mxu0 0
      %1445 = vmatpush1.bf16.msra.mxu0 %v1347
      %1446 = vmatprep.subr.bf16.mxu0 0
      %1447 = vmatpush1.bf16.msra.mxu0 %v1348
      %1448 = vmatprep.subr.bf16.mxu0 0
      %1449 = vmatpush1.bf16.msra.mxu0 %v1349
      %1450 = vmatprep.subr.bf16.mxu0 0
      %1451 = vmatpush1.bf16.msra.mxu0 %v1350
      %1452 = vmatprep.subr.bf16.mxu0 0
      %1453 = vmatpush1.bf16.msra.mxu0 %v1351
      %1454 = vmatprep.subr.bf16.mxu0 0
      %1455 = vmatpush1.bf16.msra.mxu0 %v1352
      %1456 = vmatprep.subr.bf16.mxu0 0
      %1457 = vmatpush1.bf16.msra.mxu0 %v1353
      %1458 = vmatprep.subr.bf16.mxu0 0
      %1459 = vmatpush1.bf16.msra.mxu0 %v1354
      %1460 = vmatprep.mubr.bf16.mxu0 %v1123
      %1461 = vmatmul.mubr.bf16.gmra.mrb[0].mxu0 %v1122
      %v1462 = vpop.f32.mrb[0].mxu0
      %v1463 = vadd.f32 %v1422, %v1462
      %v1464 = vpop.f32.mrb[0].mxu0
      %v1465 = vpop.f32.mrb[0].mxu0
      %v1466 = vadd.f32 %v1425, %v1465
      %v1467 = vpop.f32.mrb[0].mxu0
      %1468 = vdwg.mxu0
      %1469 = vst [vmem:[#allocation9] sm:$0xff] %v1463
      %1470 = vst [vmem:[#allocation9 + $0x8] sm:$0xff] %v1466
    $region41: #{tpu_custom_call.1} parent=1 // pred_fallthru
      _
    // Predicated region
    $region42: #{tpu_custom_call.1} parent=1 // pred_check
      _
    $region43: #{tpu_custom_call.1} parent=1 // pred_check_branch
      %1472 = sbr.rel (0) target = $region45
    $region44: #{tpu_custom_call.1} parent=1 // pred_region
      %s1474 = ssub.s32 256, 256
      %1475 = vsyncadd [#allocation5], %s1474
      %s1476 = sshll.u32 [#allocation9], 4
      %s1477 = int_to_ptr.vmem [resolvable:$true] %s1476
      %1482 = dma.vmem_to_hbm [thread:$0]  %s1477, 256, %s5, [#allocation5], 128, 128, 8
    $region45: #{tpu_custom_call.1} parent=1 // pred_fallthru
      _
    // Predicated region
    $region46: #{tpu_custom_call.1} parent=1 // pred_check
      _
    $region47: #{tpu_custom_call.1} parent=1 // pred_check_branch
      %1484 = sbr.rel (0) target = $region49
    $region48: #{tpu_custom_call.1} parent=1 // pred_region
      %1485 = dma.done [#allocation5], 256
    $region49: #{tpu_custom_call.1} parent=1 // pred_fallthru
      _
    %1486 = vsyncpa [#allocation4], 1
    %1487 = vsyncpa [#allocation7], 1
    %1488 = vsyncpa [#allocation5], 1

</llo_original>
